<compile_context>
chip_gen: v5e
topology: v5e:2x2
jax: 0.10.0
libtpu: 0.0.40
codegen_flags: <defaults>
</compile_context>

<pallas_src>
import functools

import jax
import jax.numpy as jnp
from jax.experimental import pallas as pl
from jax.experimental.pallas import tpu as pltpu

BN_EPS = 1e-5
LANE = 128
SUBLANE = 8


def _round_up(x, m):
    return (x + m - 1) // m * m


# ---------------- pass 1: accumulate sum(h), sum(h*h) with h = x @ w1 ----------------
def _stats1_kernel(x_ref, w1_ref, acc_ref):
    i = pl.program_id(0)

    @pl.when(i == 0)
    def _():
        acc_ref[...] = jnp.zeros_like(acc_ref)

    # padded rows of x are zero and there is no bias, so they contribute 0 to both sums.
    h = jnp.dot(x_ref[...], w1_ref[...], preferred_element_type=jnp.float32)
    s = jnp.sum(h, axis=0, keepdims=True)
    ss = jnp.sum(h * h, axis=0, keepdims=True)
    acc_ref[...] += jnp.concatenate([s, ss], axis=0)


# ---------------- pass 2: accumulate sum(y), sum(y*y), y = relu(BN1(h)) @ w2 ----------------
def _stats2_kernel(x_ref, w1_ref, s1_ref, w2_ref, acc_ref, *, tile_rows, n_valid):
    i = pl.program_id(0)

    @pl.when(i == 0)
    def _():
        acc_ref[...] = jnp.zeros_like(acc_ref)

    h = jnp.dot(x_ref[...], w1_ref[...], preferred_element_type=jnp.float32)
    s1 = s1_ref[...]
    h = jnp.maximum(h * s1[0:1, :] + s1[1:2, :], 0.0)      # folded BN1 + ReLU

    # zero out padded rows so they don't contaminate BN2 statistics
    row = i * tile_rows + jax.lax.broadcasted_iota(jnp.int32, (tile_rows, 1), 0)
    h = jnp.where(row < n_valid, h, 0.0)

    y = jnp.dot(h, w2_ref[...], preferred_element_type=jnp.float32)
    s = jnp.sum(y, axis=0, keepdims=True)
    ss = jnp.sum(y * y, axis=0, keepdims=True)
    acc_ref[...] += jnp.concatenate([s, ss], axis=0)


# ---------------- pass 3: apply folded BN2 and write lane-dense output ----------------
def _out_kernel(x_ref, w1_ref, s1_ref, w2_ref, s2_ref, o_ref):
    h = jnp.dot(x_ref[...], w1_ref[...], preferred_element_type=jnp.float32)
    s1 = s1_ref[...]
    h = jnp.maximum(h * s1[0:1, :] + s1[1:2, :], 0.0)
    y = jnp.dot(h, w2_ref[...], preferred_element_type=jnp.float32)
    s2 = s2_ref[...]
    o_ref[...] = (y * s2[0:1, :] + s2[1:2, :]).astype(o_ref.dtype)


def local_embedding(x, w1, b1, g1, beta1, w2, b2, *, tile_rows=512):
    """Fused LocalEmbedding forward with training-mode BatchNorm batch statistics.

    x: (B, L, Cin); w1: (Cin, H); b1, g1, beta1: (1, H); w2: (H, Cout); b2: (1, Cout).
    b1/b2 are accepted for interface parity but not applied — both conv biases are exactly
    cancelled by the following training-mode BatchNorm mean subtraction.
    """
    del b1, b2  # cancelled by BN mean subtraction
    B, L, Cin = x.shape
    H = w1.shape[1]
    Cout = w2.shape[1]
    N = B * L

    # lane-dense padding (last dims to multiples of 128), row padding to the tile size
    Cin_p = _round_up(Cin, LANE)
    H_p = _round_up(H, LANE)
    Cout_p = _round_up(Cout, LANE)
    tr = min(tile_rows, _round_up(N, SUBLANE))
    Np = _round_up(N, tr)
    grid = (Np // tr,)

    f32 = jnp.float32
    x2 = jnp.pad(x.reshape(N, Cin).astype(f32), ((0, Np - N), (0, Cin_p - Cin)))
    w1p = jnp.pad(w1.astype(f32), ((0, Cin_p - Cin), (0, H_p - H)))
    w2p = jnp.pad(w2.astype(f32), ((0, H_p - H), (0, Cout_p - Cout)))
    g1p = jnp.pad(g1.astype(f32), ((0, 0), (0, H_p - H)))
    beta1p = jnp.pad(beta1.astype(f32), ((0, 0), (0, H_p - H)))

    x_spec = pl.BlockSpec((tr, Cin_p), lambda i: (i, 0))
    w1_spec = pl.BlockSpec((Cin_p, H_p), lambda i: (0, 0))     # VMEM-resident
    w2_spec = pl.BlockSpec((H_p, Cout_p), lambda i: (0, 0))    # VMEM-resident
    s1_spec = pl.BlockSpec((2, H_p), lambda i: (0, 0))
    s2_spec = pl.BlockSpec((2, Cout_p), lambda i: (0, 0))

    arb = pltpu.CompilerParams(dimension_semantics=("arbitrary",))
    par = pltpu.CompilerParams(dimension_semantics=("parallel",))

    # ---- pass 1: moments of h = x @ w1 ----
    h_mom = pl.pallas_call(
        _stats1_kernel,
        out_shape=jax.ShapeDtypeStruct((2, H_p), f32),
        grid=grid,
        in_specs=[x_spec, w1_spec],
        out_specs=pl.BlockSpec((2, H_p), lambda i: (0, 0)),
        compiler_params=arb,
    )(x2, w1p)

    mean1 = h_mom[0:1, :] / N
    var1 = jnp.maximum(h_mom[1:2, :] / N - mean1 * mean1, 0.0)
    scale1 = g1p * jax.lax.rsqrt(var1 + BN_EPS)
    shift1 = beta1p - mean1 * scale1
    s1 = jnp.concatenate([scale1, shift1], axis=0)             # (2, H_p)

    # ---- pass 2: moments of y = relu(BN1(h)) @ w2 ----
    y_mom = pl.pallas_call(
        functools.partial(_stats2_kernel, tile_rows=tr, n_valid=N),
        out_shape=jax.ShapeDtypeStruct((2, Cout_p), f32),
        grid=grid,
        in_specs=[x_spec, w1_spec, s1_spec, w2_spec],
        out_specs=pl.BlockSpec((2, Cout_p), lambda i: (0, 0)),
        compiler_params=arb,
    )(x2, w1p, s1, w2p)

    mean2 = y_mom[0:1, :] / N
    var2 = jnp.maximum(y_mom[1:2, :] / N - mean2 * mean2, 0.0)
    scale2 = jax.lax.rsqrt(var2 + BN_EPS)
    shift2 = -mean2 * scale2
    s2 = jnp.concatenate([scale2, shift2], axis=0)             # (2, Cout_p)

    # ---- pass 3: normalized, lane-dense output; slice padding off in XLA ----
    out_p = pl.pallas_call(
        _out_kernel,
        out_shape=jax.ShapeDtypeStruct((Np, Cout_p), x.dtype),
        grid=grid,
        in_specs=[x_spec, w1_spec, s1_spec, w2_spec, s2_spec],
        out_specs=pl.BlockSpec((tr, Cout_p), lambda i: (i, 0)),
        compiler_params=par,
    )(x2, w1p, s1, w2p, s2)

    return out_p[:N, :Cout].reshape(B, L, Cout)


# ---------------- pure-JAX reference (full PyTorch semantics, incl. biases) ----------------
def reference(x, w1, b1, g1, beta1, w2, b2):
    B, L, Cin = x.shape
    xf = x.astype(jnp.float32).reshape(B * L, Cin)
    h = xf @ w1 + b1
    m1 = h.mean(0, keepdims=True)
    v1 = ((h - m1) ** 2).mean(0, keepdims=True)
    h = (h - m1) / jnp.sqrt(v1 + BN_EPS) * g1 + beta1
    h = jnp.maximum(h, 0.0)
    y = h @ w2 + b2
    m2 = y.mean(0, keepdims=True)
    v2 = ((y - m2) ** 2).mean(0, keepdims=True)
    y = (y - m2) / jnp.sqrt(v2 + BN_EPS)
    return y.reshape(B, L, -1).astype(x.dtype)


if __name__ == "__main__":
    B, L = 2, 8
    input_dim, hidden_dim, output_dim = 16, 32, 16

    key = jax.random.PRNGKey(0)
    kx, kw1, kb1, kw2, kb2 = jax.random.split(key, 5)

    x = jax.random.normal(kx, (B, L, input_dim), dtype=jnp.float32)

    # Conv1d weights (kernel_size=1): PyTorch (out, in, 1) stored pre-transposed as (in, out).
    w1 = jax.random.normal(kw1, (input_dim, hidden_dim), dtype=jnp.float32) * 0.1
    b1 = jax.random.normal(kb1, (1, hidden_dim), dtype=jnp.float32) * 0.1
    g1 = (jnp.ones((1, hidden_dim), jnp.float32)
          + 0.05 * jnp.arange(hidden_dim, dtype=jnp.float32).reshape(1, -1) / hidden_dim)
    beta1 = 0.01 * jnp.arange(hidden_dim, dtype=jnp.float32).reshape(1, -1)
    w2 = jax.random.normal(kw2, (hidden_dim, output_dim), dtype=jnp.float32) * 0.1
    b2 = jax.random.normal(kb2, (1, output_dim), dtype=jnp.float32) * 0.1

    out = local_embedding(x, w1, b1, g1, beta1, w2, b2)
    out = jax.block_until_ready(out)

    ref = reference(x, w1, b1, g1, beta1, w2, b2)
    assert out.shape == (B, L, output_dim)
    assert jnp.allclose(out, ref, atol=1e-3, rtol=1e-3), float(jnp.max(jnp.abs(out - ref)))
    print("KERNEL_OK")
</pallas_src>

<mosaic_0001>
module attributes {stable_mosaic.version = 11 : i64} {
  func.func @_stats1_kernel(%arg0: i32, %arg1: memref<16x128xf32, #tpu.memory_space<vmem>>, %arg2: memref<128x128xf32, #tpu.memory_space<vmem>>, %arg3: memref<2x128xf32, #tpu.memory_space<vmem>>) attributes {dimension_semantics = [#tpu.dimension_semantics<arbitrary>], iteration_bounds = array<i64: 1>, scalar_prefetch = 0 : i64, scratch_operands = 0 : i64, tpu.core_type = #tpu.core_type<tc>, window_params = [{transform_indices = @transform_0, window_bounds = array<i64: 16, 128>}, {pipeline_mode = #tpu.pipeline_mode<synchronous>, transform_indices = @transform_1, window_bounds = array<i64: 128, 128>}, {pipeline_mode = #tpu.pipeline_mode<synchronous>, transform_indices = @transform_2, window_bounds = array<i64: 2, 128>}]} {
    %c0_i32 = arith.constant 0 : i32
    %0 = arith.cmpi eq, %arg0, %c0_i32 : i32
    %1 = arith.extui %0 : i1 to i32
    %c0_i32_0 = arith.constant 0 : i32
    %2 = arith.cmpi ne, %1, %c0_i32_0 : i32
    scf.if %2 {
      %cst_10 = arith.constant 0.000000e+00 : f32
      %15 = vector.broadcast %cst_10 : f32 to vector<2x128xf32>
      %c0_11 = arith.constant 0 : index
      %c0_12 = arith.constant 0 : index
      %16 = vector.load %arg3[%c0_11, %c0_12] : memref<2x128xf32, #tpu.memory_space<vmem>>, vector<2x128xf32>
      tpu.vector_store %arg3[%c0_11, %c0_12], %15 {strides = array<i32>} : memref<2x128xf32, #tpu.memory_space<vmem>>, vector<2x128xf32>,
    } else {
    }
    %c0 = arith.constant 0 : index
    %c0_1 = arith.constant 0 : index
    %3 = vector.load %arg1[%c0, %c0_1] : memref<16x128xf32, #tpu.memory_space<vmem>>, vector<16x128xf32>
    %c0_2 = arith.constant 0 : index
    %c0_3 = arith.constant 0 : index
    %4 = vector.load %arg2[%c0_2, %c0_3] : memref<128x128xf32, #tpu.memory_space<vmem>>, vector<128x128xf32>
    %cst = arith.constant dense<0.000000e+00> : vector<16x128xf32>
    %5 = tpu.matmul %3, %4, %cst {dimension_numbers = #tpu.dot_dimension_numbers<[1], [0], [0], [1], [0, 0, 1, 1], [], []>} : vector<16x128xf32>, vector<128x128xf32>, vector<16x128xf32> -> vector<16x128xf32>
    %cst_4 = arith.constant dense<0.000000e+00> : vector<128xf32>
    %6 = vector.multi_reduction <add>, %5, %cst_4 [0] : vector<16x128xf32> to vector<128xf32>
    %7 = vector.shape_cast %6 : vector<128xf32> to vector<1x128xf32>
    %8 = arith.mulf %5, %5 : vector<16x128xf32>
    %cst_5 = arith.constant dense<0.000000e+00> : vector<128xf32>
    %9 = vector.multi_reduction <add>, %8, %cst_5 [0] : vector<16x128xf32> to vector<128xf32>
    %10 = vector.shape_cast %9 : vector<128xf32> to vector<1x128xf32>
    %c0_6 = arith.constant 0 : index
    %c0_7 = arith.constant 0 : index
    %11 = vector.load %arg3[%c0_6, %c0_7] : memref<2x128xf32, #tpu.memory_space<vmem>>, vector<2x128xf32>
    %12 = tpu.concatenate %7, %10 in 0 : vector<1x128xf32>, vector<1x128xf32> -> vector<2x128xf32>
    %13 = arith.addf %11, %12 : vector<2x128xf32>
    %c0_8 = arith.constant 0 : index
    %c0_9 = arith.constant 0 : index
    %14 = vector.load %arg3[%c0_8, %c0_9] : memref<2x128xf32, #tpu.memory_space<vmem>>, vector<2x128xf32>
    tpu.vector_store %arg3[%c0_8, %c0_9], %13 {strides = array<i32>} : memref<2x128xf32, #tpu.memory_space<vmem>>, vector<2x128xf32>,
    return
  }
  func.func @transform_0(%arg0: i32) -> (i32, i32) {
    %c0_i32 = arith.constant 0 : i32
    %c0_i32_0 = arith.constant 0 : i32
    return %arg0, %c0_i32 : i32, i32
  }
  func.func @transform_1(%arg0: i32) -> (i32, i32) {
    %c0_i32 = arith.constant 0 : i32
    %c0_i32_0 = arith.constant 0 : i32
    %c0_i32_1 = arith.constant 0 : i32
    return %c0_i32, %c0_i32_0 : i32, i32
  }
  func.func @transform_2(%arg0: i32) -> (i32, i32) {
    %c0_i32 = arith.constant 0 : i32
    %c0_i32_0 = arith.constant 0 : i32
    %c0_i32_1 = arith.constant 0 : i32
    return %c0_i32, %c0_i32_0 : i32, i32
  }
}

</mosaic_0001>

<llo_original>
// kernel: tpu_custom_call.1
$region0: #{tpu_custom_call.1}
  #allocation0 [shape = 'u32[]', space=smem, size = 0x4, offset = 0x4, fixed_abs, tag = 'smem constant byte address 0x4 - core index']
  #allocation1 [shape = 'u32[72,128]{1,0:T(1,128)}', space=vmem, size = 0x9000, scoped, tag = 'internal scratch']
  %s0 = inlined_call_operand.hbm [shape: f32[16,128], index: 0, kind: input, shape index: {}]
  %s1 = inlined_call_operand.hbm [shape: f32[128,128], index: 1, kind: input, shape index: {}]
  %s2 = inlined_call_operand.hbm [shape: f32[2,128], index: 2, kind: output, shape index: {}]
  %s3 = sld [smem:[#allocation0]]
  $region30: #{tpu_custom_call.1} parent=0
    _
  %s5 = ssub.s32 1, %s3
  %s6 = scalar_select 0, %s5, %s3
  $region1: #{tpu_custom_call.1} parent=0
    #allocation2 [shape = 'u8[8192]{0}', space=vmem, size = 0x2000, scoped, tag = 'input window, operand 0, single buffered']
    #allocation3 [shape = 's32[1]{0}', space=sflag, size = 0x4, scoped, tag = 'scoped memory for tpu_custom_call.1']
    #allocation4 [shape = 's32[1]{0}', space=sflag, size = 0x4, scoped, tag = 'scoped memory for tpu_custom_call.1']
    #allocation5 [shape = 'u8[65536]{0}', space=vmem, size = 0x10000, scoped, tag = 'input window, operand 1, single buffered']
    #allocation6 [shape = 's32[1]{0}', space=sflag, size = 0x4, scoped, tag = 'scoped memory for tpu_custom_call.1']
    #allocation7 [shape = 'u8[1024]{0}', space=vmem, size = 0x400, scoped, tag = 'output window, operand 0, single buffered']
    %7 = vsyncpa [#allocation3], 0
    %8 = vsyncpa [#allocation6], 0
    %9 = vsyncpa [#allocation4], 0
    // Predicated region
    $region2: #{tpu_custom_call.1} parent=1 // pred_check
      _
    $region3: #{tpu_custom_call.1} parent=1 // pred_check_branch
      %11 = sbr.rel (0) target = $region5
    $region4: #{tpu_custom_call.1} parent=1 // pred_region
      %13 = vsyncadd [#allocation3], 0
      %s14 = sshll.u32 %s0, 4
      %s15 = int_to_ptr.hbm [resolvable:$true] %s14
      %s16 = sshll.u32 [#allocation2], 4
      %s17 = int_to_ptr.vmem [resolvable:$true] %s16
      %22 = dma.hbm_to_vmem [thread:$0]  %s15, 256, %s17, [#allocation3], 128, 128, 8
    $region5: #{tpu_custom_call.1} parent=1 // pred_fallthru
      _
    // Predicated region
    $region6: #{tpu_custom_call.1} parent=1 // pred_check
      _
    $region7: #{tpu_custom_call.1} parent=1 // pred_check_branch
      %24 = sbr.rel (0) target = $region9
    $region8: #{tpu_custom_call.1} parent=1 // pred_region
      %26 = vsyncadd [#allocation6], 0
      %s27 = sshll.u32 %s1, 4
      %s28 = int_to_ptr.hbm [resolvable:$true] %s27
      %s29 = sshll.u32 [#allocation5], 4
      %s30 = int_to_ptr.vmem [resolvable:$true] %s29
      %35 = dma.hbm_to_vmem [thread:$0]  %s28, 2048, %s30, [#allocation6], 128, 128, 8
    $region9: #{tpu_custom_call.1} parent=1 // pred_fallthru
      _
    // Predicated region
    $region10: #{tpu_custom_call.1} parent=1 // pred_check
      _
    $region11: #{tpu_custom_call.1} parent=1 // pred_check_branch
      %37 = sbr.rel (0) target = $region13
    $region12: #{tpu_custom_call.1} parent=1 // pred_region
      %39 = dma.done [#allocation3], 256
    $region13: #{tpu_custom_call.1} parent=1 // pred_fallthru
      _
    // Predicated region
    $region14: #{tpu_custom_call.1} parent=1 // pred_check
      _
    $region15: #{tpu_custom_call.1} parent=1 // pred_check_branch
      %41 = sbr.rel (0) target = $region17
    $region16: #{tpu_custom_call.1} parent=1 // pred_region
      %43 = dma.done [#allocation6], 2048
    $region17: #{tpu_custom_call.1} parent=1 // pred_fallthru
      _
    %p44 = scmp.eq.s32.totalorder 0, 0
    // Predicated region
    $region18: #{tpu_custom_call.1} parent=1 // pred_check
      %p45 = pneg %p44
    $region19: #{tpu_custom_call.1} parent=1 // pred_check_branch
      %47 = sbr.rel (%p45) target = $region21
    $region20: #{tpu_custom_call.1} parent=1 // pred_region
      %48 = vst [vmem:[#allocation7] sm:$0x3] 0.0
    $region21: #{tpu_custom_call.1} parent=1 // pred_fallthru
      _
    %v49 = vld [vmem:[#allocation2] sm:$0xff]
    %v50 = vld [vmem:[#allocation2 + $0x8] sm:$0xff]
    %v51 = vld [vmem:[#allocation5] sm:$0xff]
    %v52 = vld [vmem:[#allocation5 + $0x8] sm:$0xff]
    %v53 = vld [vmem:[#allocation5 + $0x10] sm:$0xff]
    %v54 = vld [vmem:[#allocation5 + $0x18] sm:$0xff]
    %v55 = vld [vmem:[#allocation5 + $0x20] sm:$0xff]
    %v56 = vld [vmem:[#allocation5 + $0x28] sm:$0xff]
    %v57 = vld [vmem:[#allocation5 + $0x30] sm:$0xff]
    %v58 = vld [vmem:[#allocation5 + $0x38] sm:$0xff]
    %v59 = vld [vmem:[#allocation5 + $0x40] sm:$0xff]
    %v60 = vld [vmem:[#allocation5 + $0x48] sm:$0xff]
    %v61 = vld [vmem:[#allocation5 + $0x50] sm:$0xff]
    %v62 = vld [vmem:[#allocation5 + $0x58] sm:$0xff]
    %v63 = vld [vmem:[#allocation5 + $0x60] sm:$0xff]
    %v64 = vld [vmem:[#allocation5 + $0x68] sm:$0xff]
    %v65 = vld [vmem:[#allocation5 + $0x70] sm:$0xff]
    %v66 = vld [vmem:[#allocation5 + $0x78] sm:$0xff]
    %67 = vmatpush.msra.mxu0 %v66
    %68 = vmatpush.msra.mxu0 %v65
    %69 = vmatpush.msra.mxu0 %v64
    %70 = vmatpush.msra.mxu0 %v63
    %71 = vmatpush.msra.mxu0 %v62
    %72 = vmatpush.msra.mxu0 %v61
    %73 = vmatpush.msra.mxu0 %v60
    %74 = vmatpush.msra.mxu0 %v59
    %75 = vmatpush.msra.mxu0 %v58
    %76 = vmatpush.msra.mxu0 %v57
    %77 = vmatpush.msra.mxu0 %v56
    %78 = vmatpush.msra.mxu0 %v55
    %79 = vmatpush.msra.mxu0 %v54
    %80 = vmatpush.msra.mxu0 %v53
    %81 = vmatpush.msra.mxu0 %v52
    %82 = vmatpush.msra.mxu0 %v51
    %83 = vmatmul.f32.gmra.mxu0 %v49
    %v84 = vpop.f32.mrf.mxu0
    %v85 = vadd.f32 0.0, %v84
    %86 = vmatmul.f32.gmra.mxu0 %v50
    %v87 = vpop.f32.mrf.mxu0
    %v88 = vadd.f32 0.0, %v87
    %89 = vdwg.mxu0
    %v90 = vadd.f32 %v85, %v88
    %v91 = vrot.slane %v90, 4
    %v92 = vadd.f32 %v90, %v91
    %v93 = vrot.slane %v92, 2
    %v94 = vadd.f32 %v92, %v93
    %v95 = vrot.slane %v94, 1
    %v96 = vadd.f32 %v94, %v95
    %v97 = vmul.f32 %v85, %v85
    %v98 = vmul.f32 %v88, %v88
    %v99 = vadd.f32 %v97, %v98
    %v100 = vrot.slane %v99, 4
    %v101 = vadd.f32 %v99, %v100
    %v102 = vrot.slane %v101, 2
    %v103 = vadd.f32 %v101, %v102
    %v104 = vrot.slane %v103, 1
    %v105 = vadd.f32 %v103, %v104
    %v106 = vld [vmem:[#allocation7] sm:$0x3]
    %vm107 = vcmask 1040384
    %v108 = vsel %vm107, %v96, %v105
    %v109 = vadd.f32 %v106, %v108
    %110 = vst [vmem:[#allocation7] sm:$0x3] %v109
    // Predicated region
    $region22: #{tpu_custom_call.1} parent=1 // pred_check
      _
    $region23: #{tpu_custom_call.1} parent=1 // pred_check_branch
      %112 = sbr.rel (0) target = $region25
    $region24: #{tpu_custom_call.1} parent=1 // pred_region
      %114 = vsyncadd [#allocation4], 0
      %s116 = sshll.u32 [#allocation7], 4
      %s117 = int_to_ptr.vmem [resolvable:$true] %s116
      %s118 = sshll.u32 %s2, 4
      %s119 = int_to_ptr.hbm [resolvable:$true] %s118
      %121 = dma.vmem_to_hbm [thread:$0]  %s117, 32, %s119, [#allocation4]
    $region25: #{tpu_custom_call.1} parent=1 // pred_fallthru
      _
    // Predicated region
    $region26: #{tpu_custom_call.1} parent=1 // pred_check
      _
    $region27: #{tpu_custom_call.1} parent=1 // pred_check_branch
      %123 = sbr.rel (0) target = $region29
    $region28: #{tpu_custom_call.1} parent=1 // pred_region
      %125 = dma.done [#allocation4], 32
    $region29: #{tpu_custom_call.1} parent=1 // pred_fallthru
      _
    %126 = vsyncpa [#allocation3], 1
    %127 = vsyncpa [#allocation6], 1
    %128 = vsyncpa [#allocation4], 1

</llo_original>
